<compile_context>
chip_gen: v5e
topology: v5e:2x2
jax: 0.10.0
libtpu: 0.0.40
codegen_flags: <defaults>
</compile_context>

<pallas_src>
import re

import jax
import jax.numpy as jnp
from jax import lax
from jax.experimental import pallas as pl
from jax.experimental.pallas import tpu as pltpu


_SLACK_BYTES = 4 * 2**20         # headroom for Mosaic-internal scratch
_MIN_VMEM_REQUEST = 32 * 2**20


def _cdiv(a, b):
    return -(-a // b)


def _tpu_generation():
    """Best-effort TPU generation from device_kind ('TPU v5 lite' -> 5, ...)."""
    try:
        kind = jax.devices()[0].device_kind.lower()
    except Exception:
        return 0
    m = re.search(r"(\d+)", kind)
    return int(m.group(1)) if m else 0


def _hw_config(gen):
    """Per-generation per-array block-size target and scoped-VMEM request cap."""
    if gen >= 7:   # v7x: 64 MiB VMEM/TC, 2 TCs -> small blocks, core-parallel grid.
        return {"target_block_bytes": int(2.5 * 2**20), "vmem_cap": 52 * 2**20,
                "core_parallel": True}
    if gen == 6:   # v6e: 128 MiB physical VMEM, 1 TC -> big slabs.
        return {"target_block_bytes": 6 * 2**20, "vmem_cap": 96 * 2**20,
                "core_parallel": False}
    if gen == 5:   # v5e / v5p.
        return {"target_block_bytes": 4 * 2**20, "vmem_cap": 80 * 2**20,
                "core_parallel": False}
    if gen == 4:
        return {"target_block_bytes": 2 * 2**20, "vmem_cap": 48 * 2**20,
                "core_parallel": False}
    # v2/v3/unknown: conservative (16 MiB-class VMEM).
    return {"target_block_bytes": 1 * 2**20, "vmem_cap": 14 * 2**20,
            "core_parallel": False}


def _compute_dtype(x_dtype, gen):
    # v6e/v7x VPU/EUP are bf16-native: keeping the gradient arithmetic in bf16
    # halves vreg/VMEM temporary pressure.  v5e and older upcast to f32.
    if jnp.dtype(x_dtype) == jnp.dtype(jnp.bfloat16) and gen >= 6:
        return jnp.bfloat16
    return jnp.float32


# --------------------------------------------------------------------------
# Path A: small planes, fused into (G, cb, H*W) lane-dense slabs.
# --------------------------------------------------------------------------
def _make_flat_kernel(H, W, compute_dtype):
    L = H * W

    def kernel(x_ref, h_ref, v_ref, m_ref):
        x = x_ref[0].astype(compute_dtype)                # (cb, L) flattened planes
        zero = jnp.zeros((), compute_dtype)

        # Position-within-plane masks as a single (1, L) sublane, broadcast
        # against (cb, L) inside the selects (no block-sized int temporary).
        p = lax.broadcasted_iota(jnp.int32, (1, L), 1)

        # Vertical gradient: x[p+W] - x[p-W], zero past the first / last row.
        if H >= 2:
            up = pltpu.roll(x, shift=L - W, axis=1)       # lane p holds x[p + W]
            dn = pltpu.roll(x, shift=W, axis=1)           # lane p holds x[p - W]
            v = jnp.where(p < L - W, up, zero) - jnp.where(p >= W, dn, zero)
        else:
            v = jnp.zeros_like(x)

        # Horizontal gradient: x[p+1] - x[p-1], zero at columns 0 / W-1.
        if W >= 2:
            rt = pltpu.roll(x, shift=L - 1, axis=1)       # lane p holds x[p + 1]
            lf = pltpu.roll(x, shift=1, axis=1)           # lane p holds x[p - 1]
            col = (p & (W - 1)) if (W & (W - 1)) == 0 else (p % W)
            h = jnp.where(col < W - 1, rt, zero) - jnp.where(col > 0, lf, zero)
        else:
            h = jnp.zeros_like(x)

        vf = v.astype(jnp.float32)
        hf = h.astype(jnp.float32)
        m = jnp.sqrt(vf * vf + hf * hf + 1e-6)            # EUP

        h_ref[0] = h.astype(h_ref.dtype)
        v_ref[0] = v.astype(v_ref.dtype)
        m_ref[0] = m.astype(m_ref.dtype)

    return kernel


def _choose_cb(NC, cap):
    """Planes per block: multiple of 8 whenever NC allows (sublane-dense)."""
    cap = max(1, min(cap, NC))
    if NC < 8:
        return NC                         # NC itself is below one sublane group
    cap8 = (cap // 8) * 8
    if cap8 >= 8:
        for d in range(cap8, 7, -8):      # largest multiple-of-8 divisor: no padding
            if NC % d == 0:
                return d
        return cap8                       # ragged: wrapper zero-pads NC up to G*cb
    for d in range(cap, 0, -1):           # (rare) cap < 8: keep an exact divisor
        if NC % d == 0:
            return d
    return 1


def _flat_call(x, N, C, H, W, cfg, compute_dtype, force_planes_per_block):
    NC, L = N * C, H * W
    itemsize = jnp.dtype(x.dtype).itemsize
    per_plane_io = L * itemsize
    # 4 arrays x 2 pipeline buffers (io dtype) + ~8 full-block f32-ish temporaries.
    per_plane_cost = 8 * per_plane_io + 8 * L * 4

    cap = max(1, cfg["target_block_bytes"] // per_plane_io)
    cap = min(cap, max(1, (cfg["vmem_cap"] - _SLACK_BYTES) // per_plane_cost))
    if cfg["core_parallel"] and NC >= 32:
        # v7x: keep G >= 4 so the CORE_PARALLEL axis splits across both TCs.
        cap = min(cap, max(8, (NC // 4) // 8 * 8))
    if force_planes_per_block is not None:
        cap = min(cap, int(force_planes_per_block))
    cap = min(cap, NC)

    cb = _choose_cb(NC, cap)
    G = _cdiv(NC, cb)
    NCp = G * cb

    x2 = x.reshape(NC, L)
    if NCp != NC:                         # ragged plane count: zero-pad, slice later
        x2 = jnp.pad(x2, ((0, NCp - NC), (0, 0)))
    x3 = x2.reshape(G, cb, L)

    spec = pl.BlockSpec((1, cb, L), lambda i: (i, 0, 0))
    out_sd = jax.ShapeDtypeStruct((G, cb, L), x.dtype)

    vmem_limit = min(cfg["vmem_cap"],
                     max(_MIN_VMEM_REQUEST, cb * per_plane_cost + _SLACK_BYTES))

    n_elem = NCp * L
    cost = pl.CostEstimate(flops=7 * n_elem, transcendentals=n_elem,
                           bytes_accessed=4 * n_elem * itemsize)

    if cfg["core_parallel"] and G >= 2:
        sem = (pltpu.CORE_PARALLEL,)
    else:
        sem = ("parallel",)

    x_h, x_v, x_m = pl.pallas_call(
        _make_flat_kernel(H, W, compute_dtype),
        out_shape=(out_sd, out_sd, out_sd),
        grid_spec=pltpu.PrefetchScalarGridSpec(
            num_scalar_prefetch=0,
            grid=(G,),
            in_specs=[spec],
            out_specs=(spec, spec, spec),
        ),
        compiler_params=pltpu.CompilerParams(
            dimension_semantics=sem,
            vmem_limit_bytes=int(vmem_limit),
        ),
        cost_estimate=cost,
    )(x3)

    def post(o):
        return o.reshape(NCp, H, W)[:NC].reshape(N, C, H, W)

    return post(x_h), post(x_v), post(x_m)


# --------------------------------------------------------------------------
# Path B: large planes, row-tiled with +/-1-row halos (8-row halo blocks).
# --------------------------------------------------------------------------
def _make_rows_kernel(TH, W, compute_dtype):
    def kernel(x_ref, up_ref, dn_ref, h_ref, v_ref, m_ref):
        i = pl.program_id(1)
        x = x_ref[0].astype(compute_dtype)                # (TH, W)
        zero = jnp.zeros((), compute_dtype)
        row = lax.broadcasted_iota(jnp.int32, (TH, 1), 0)

        # Vertical: neighbours come from the rolled block, except at the block
        # edges where the halo blocks supply rows i*TH-1 and i*TH+TH.
        below = pltpu.roll(x, shift=TH - 1, axis=0)       # row r holds x[r + 1]
        above = pltpu.roll(x, shift=1, axis=0)            # row r holds x[r - 1]
        nxt = dn_ref[0, 0:1, :].astype(compute_dtype)     # plane row i*TH + TH
        prv = up_ref[0, 7:8, :].astype(compute_dtype)     # plane row i*TH - 1
        prv = jnp.where(i > 0, prv, zero)                 # top of the plane
        below = jnp.where(row == TH - 1, nxt, below)
        above = jnp.where(row == 0, prv, above)
        v = below - above

        # Horizontal: purely within a row.
        if W >= 2:
            col = lax.broadcasted_iota(jnp.int32, (1, W), 1)
            rt = pltpu.roll(x, shift=W - 1, axis=1)       # col c holds x[c + 1]
            lf = pltpu.roll(x, shift=1, axis=1)           # col c holds x[c - 1]
            h = jnp.where(col < W - 1, rt, zero) - jnp.where(col > 0, lf, zero)
        else:
            h = jnp.zeros_like(x)

        vf = v.astype(jnp.float32)
        hf = h.astype(jnp.float32)
        m = jnp.sqrt(vf * vf + hf * hf + 1e-6)

        h_ref[0] = h.astype(h_ref.dtype)
        v_ref[0] = v.astype(v_ref.dtype)
        m_ref[0] = m.astype(m_ref.dtype)

    return kernel


def _rows_call(x, N, C, H, W, cfg, compute_dtype, force_row_block):
    NC = N * C
    itemsize = jnp.dtype(x.dtype).itemsize
    per_row_io = W * itemsize
    per_row_cost = 8 * per_row_io + 8 * W * 4

    th = max(1, cfg["target_block_bytes"] // per_row_io)
    th = min(th, max(8, (cfg["vmem_cap"] - _SLACK_BYTES) // per_row_cost))
    th = max(8, (th // 8) * 8)
    if force_row_block is not None:
        th = max(8, (int(force_row_block) // 8) * 8)

    nH = _cdiv(H, th)
    Hin = nH * th + 8            # >= H + 8: guarantees an all-zero 8-row halo chunk
    Hout = nH * th

    xr = x.reshape(NC, H, W)
    xr = jnp.pad(xr, ((0, 0), (0, Hin - H), (0, 0)))      # zero rows below the plane

    cpb = th // 8                # halo-chunk stride per main block
    x_spec = pl.BlockSpec((1, th, W), lambda n, i: (n, i, 0))
    up_spec = pl.BlockSpec((1, 8, W), lambda n, i: (n, jnp.maximum(i * cpb - 1, 0), 0))
    dn_spec = pl.BlockSpec((1, 8, W), lambda n, i: (n, (i + 1) * cpb, 0))
    out_spec = pl.BlockSpec((1, th, W), lambda n, i: (n, i, 0))
    out_sd = jax.ShapeDtypeStruct((NC, Hout, W), x.dtype)

    vmem_limit = min(cfg["vmem_cap"],
                     max(_MIN_VMEM_REQUEST,
                         th * per_row_cost + 32 * per_row_io + _SLACK_BYTES))

    n_elem = NC * Hout * W
    cost = pl.CostEstimate(flops=7 * n_elem, transcendentals=n_elem,
                           bytes_accessed=4 * n_elem * itemsize)

    if cfg["core_parallel"] and NC >= 2:
        sem = (pltpu.CORE_PARALLEL, pltpu.ARBITRARY)
    else:
        sem = ("parallel", "arbitrary")

    x_h, x_v, x_m = pl.pallas_call(
        _make_rows_kernel(th, W, compute_dtype),
        out_shape=(out_sd, out_sd, out_sd),
        grid_spec=pltpu.PrefetchScalarGridSpec(
            num_scalar_prefetch=0,
            grid=(NC, nH),
            in_specs=[x_spec, up_spec, dn_spec],
            out_specs=(out_spec, out_spec, out_spec),
        ),
        compiler_params=pltpu.CompilerParams(
            dimension_semantics=sem,
            vmem_limit_bytes=int(vmem_limit),
        ),
        cost_estimate=cost,
    )(xr, xr, xr)

    def post(o):
        return o[:, :H, :].reshape(N, C, H, W)

    return post(x_h), post(x_v), post(x_m)


# --------------------------------------------------------------------------
# Public wrapper.
# --------------------------------------------------------------------------
def get_gradient_nopadding(x, *, _force_row_tiling=False, _force_row_block=None,
                           _force_planes_per_block=None):
    """x: (N, C, H, W). Returns (x_h, x_v, x_mag) matching Get_gradient_nopadding.

    Underscore kwargs exist only to force/test a specific tiling path."""
    N, C, H, W = x.shape
    NC, L = N * C, H * W
    gen = _tpu_generation()
    cfg = _hw_config(gen)
    compute_dtype = _compute_dtype(x.dtype, gen)
    itemsize = jnp.dtype(x.dtype).itemsize

    per_plane_io = L * itemsize
    per_plane_cost = 8 * per_plane_io + 8 * L * 4
    group = min(NC, 8)           # a sublane-dense group of planes
    flat_ok = (group * per_plane_io <= cfg["target_block_bytes"]
               and group * per_plane_cost + _SLACK_BYTES <= cfg["vmem_cap"])

    if _force_row_tiling or not flat_ok:
        return _rows_call(x, N, C, H, W, cfg, compute_dtype, _force_row_block)
    return _flat_call(x, N, C, H, W, cfg, compute_dtype, _force_planes_per_block)


def _reference(x):
    # Pure-JAX reference reproducing F.conv2d(padding=1) with the fixed kernels.
    xp = jnp.pad(x, ((0, 0), (0, 0), (1, 1), (1, 1)))
    x_v = xp[:, :, 2:, 1:-1] - xp[:, :, :-2, 1:-1]   # x[y+1] - x[y-1]
    x_h = xp[:, :, 1:-1, 2:] - xp[:, :, 1:-1, :-2]   # x[., x+1] - x[., x-1]
    mag = jnp.sqrt(x_v ** 2 + x_h ** 2 + 1e-6)
    return x_h, x_v, mag


if __name__ == "__main__":
    key = jax.random.PRNGKey(0)

    # 1) Default plane-fused path (NC = 8 -> one sublane-dense (1, 8, 256) block).
    x = jax.random.normal(key, (2, 4, 16, 16), dtype=jnp.float32)
    x_h, x_v, x_m = jax.block_until_ready(get_gradient_nopadding(x))
    rh, rv, rm = _reference(x)
    assert jnp.allclose(x_h, rh, atol=1e-5), "horizontal gradient mismatch"
    assert jnp.allclose(x_v, rv, atol=1e-5), "vertical gradient mismatch"
    assert jnp.allclose(x_m, rm, atol=1e-5), "magnitude mismatch"

    # 2) Plane-fused path with a ragged plane count (NC = 20, cb forced to 8:
    #    exercises the cdiv grid + zero-padding of the plane axis).
    k2 = jax.random.fold_in(key, 1)
    x2 = jax.random.normal(k2, (4, 5, 16, 16), dtype=jnp.float32)
    o2 = jax.block_until_ready(
        get_gradient_nopadding(x2, _force_planes_per_block=8))
    for a, b in zip(o2, _reference(x2)):
        assert jnp.allclose(a, b, atol=1e-5), "ragged plane-fused path mismatch"

    # 3) Row-tiled halo path (used for large planes; forced small here so it is
    #    exercised, with a ragged H to cover the bottom-padding logic).
    k3 = jax.random.fold_in(key, 2)
    x3 = jax.random.normal(k3, (1, 3, 37, 128), dtype=jnp.float32)
    o3 = jax.block_until_ready(
        get_gradient_nopadding(x3, _force_row_tiling=True, _force_row_block=16))
    for a, b in zip(o3, _reference(x3)):
        assert jnp.allclose(a, b, atol=1e-5), "row-tiled halo path mismatch"

    print("KERNEL_OK")
</pallas_src>

<mosaic_0001>
module attributes {stable_mosaic.version = 11 : i64} {
  func.func @kernel(%arg0: i32, %arg1: memref<1x8x256xf32, #tpu.memory_space<vmem>>, %arg2: memref<1x8x256xf32, #tpu.memory_space<vmem>>, %arg3: memref<1x8x256xf32, #tpu.memory_space<vmem>>, %arg4: memref<1x8x256xf32, #tpu.memory_space<vmem>>) attributes {dimension_semantics = [#tpu.dimension_semantics<parallel>], iteration_bounds = array<i64: 1>, scalar_prefetch = 0 : i64, scratch_operands = 0 : i64, tpu.core_type = #tpu.core_type<tc>, window_params = [{transform_indices = @transform_0, window_bounds = array<i64: 1, 8, 256>}, {transform_indices = @transform_1, window_bounds = array<i64: 1, 8, 256>}, {transform_indices = @transform_2, window_bounds = array<i64: 1, 8, 256>}, {transform_indices = @transform_3, window_bounds = array<i64: 1, 8, 256>}]} {
    %c0 = arith.constant 0 : index
    %c0_0 = arith.constant 0 : index
    %c0_1 = arith.constant 0 : index
    %0 = vector.load %arg1[%c0, %c0_0, %c0_1] : memref<1x8x256xf32, #tpu.memory_space<vmem>>, vector<1x8x256xf32>
    %1 = vector.shape_cast %0 : vector<1x8x256xf32> to vector<8x256xf32>
    %2 = tpu.iota {dimensions = array<i32: 1>} : vector<1x256xi32>
    %c240_i32 = arith.constant 240 : i32
    %3 = tpu.dynamic_rotate %1 by %c240_i32 dim 1 : vector<8x256xf32>, i32 -> vector<8x256xf32>
    %c16_i32 = arith.constant 16 : i32
    %4 = tpu.dynamic_rotate %1 by %c16_i32 dim 1 : vector<8x256xf32>, i32 -> vector<8x256xf32>
    %c240_i32_2 = arith.constant 240 : i32
    %5 = vector.broadcast %c240_i32_2 : i32 to vector<1x256xi32>
    %6 = arith.cmpi slt, %2, %5 : vector<1x256xi32>
    %cst = arith.constant 0.000000e+00 : f32
    %7 = vector.shape_cast %6 : vector<1x256xi1> to vector<1x256xi1>
    %8 = vector.broadcast %7 : vector<1x256xi1> to vector<8x256xi1>
    %9 = vector.broadcast %cst : f32 to vector<8x256xf32>
    %10 = arith.select %8, %3, %9 : vector<8x256xi1>, vector<8x256xf32>
    %c16_i32_3 = arith.constant 16 : i32
    %11 = vector.broadcast %c16_i32_3 : i32 to vector<1x256xi32>
    %12 = arith.cmpi sge, %2, %11 : vector<1x256xi32>
    %cst_4 = arith.constant 0.000000e+00 : f32
    %13 = vector.shape_cast %12 : vector<1x256xi1> to vector<1x256xi1>
    %14 = vector.broadcast %13 : vector<1x256xi1> to vector<8x256xi1>
    %15 = vector.broadcast %cst_4 : f32 to vector<8x256xf32>
    %16 = arith.select %14, %4, %15 : vector<8x256xi1>, vector<8x256xf32>
    %17 = arith.subf %10, %16 : vector<8x256xf32>
    %c255_i32 = arith.constant 255 : i32
    %18 = tpu.dynamic_rotate %1 by %c255_i32 dim 1 : vector<8x256xf32>, i32 -> vector<8x256xf32>
    %c1_i32 = arith.constant 1 : i32
    %19 = tpu.dynamic_rotate %1 by %c1_i32 dim 1 : vector<8x256xf32>, i32 -> vector<8x256xf32>
    %c15_i32 = arith.constant 15 : i32
    %20 = vector.broadcast %c15_i32 : i32 to vector<1x256xi32>
    %21 = arith.andi %2, %20 : vector<1x256xi32>
    %c15_i32_5 = arith.constant 15 : i32
    %22 = vector.broadcast %c15_i32_5 : i32 to vector<1x256xi32>
    %23 = arith.cmpi slt, %21, %22 : vector<1x256xi32>
    %cst_6 = arith.constant 0.000000e+00 : f32
    %24 = vector.shape_cast %23 : vector<1x256xi1> to vector<1x256xi1>
    %25 = vector.broadcast %24 : vector<1x256xi1> to vector<8x256xi1>
    %26 = vector.broadcast %cst_6 : f32 to vector<8x256xf32>
    %27 = arith.select %25, %18, %26 : vector<8x256xi1>, vector<8x256xf32>
    %c0_i32 = arith.constant 0 : i32
    %28 = vector.broadcast %c0_i32 : i32 to vector<1x256xi32>
    %29 = arith.cmpi sgt, %21, %28 : vector<1x256xi32>
    %cst_7 = arith.constant 0.000000e+00 : f32
    %30 = vector.shape_cast %29 : vector<1x256xi1> to vector<1x256xi1>
    %31 = vector.broadcast %30 : vector<1x256xi1> to vector<8x256xi1>
    %32 = vector.broadcast %cst_7 : f32 to vector<8x256xf32>
    %33 = arith.select %31, %19, %32 : vector<8x256xi1>, vector<8x256xf32>
    %34 = arith.subf %27, %33 : vector<8x256xf32>
    %35 = arith.mulf %17, %17 : vector<8x256xf32>
    %36 = arith.mulf %34, %34 : vector<8x256xf32>
    %37 = arith.addf %35, %36 : vector<8x256xf32>
    %cst_8 = arith.constant 9.99999997E-7 : f32
    %38 = vector.broadcast %cst_8 : f32 to vector<8x256xf32>
    %39 = arith.addf %37, %38 : vector<8x256xf32>
    %40 = math.sqrt %39 : vector<8x256xf32>
    %c0_9 = arith.constant 0 : index
    %c0_10 = arith.constant 0 : index
    %c0_11 = arith.constant 0 : index
    %41 = vector.load %arg2[%c0_9, %c0_10, %c0_11] : memref<1x8x256xf32, #tpu.memory_space<vmem>>, vector<1x8x256xf32>
    %42 = vector.shape_cast %41 : vector<1x8x256xf32> to vector<8x256xf32>
    %43 = vector.shape_cast %34 : vector<8x256xf32> to vector<1x8x256xf32>
    tpu.vector_store %arg2[%c0_9, %c0_10, %c0_11], %43 {strides = array<i32>} : memref<1x8x256xf32, #tpu.memory_space<vmem>>, vector<1x8x256xf32>,
    %c0_12 = arith.constant 0 : index
    %c0_13 = arith.constant 0 : index
    %c0_14 = arith.constant 0 : index
    %44 = vector.load %arg3[%c0_12, %c0_13, %c0_14] : memref<1x8x256xf32, #tpu.memory_space<vmem>>, vector<1x8x256xf32>
    %45 = vector.shape_cast %44 : vector<1x8x256xf32> to vector<8x256xf32>
    %46 = vector.shape_cast %17 : vector<8x256xf32> to vector<1x8x256xf32>
    tpu.vector_store %arg3[%c0_12, %c0_13, %c0_14], %46 {strides = array<i32>} : memref<1x8x256xf32, #tpu.memory_space<vmem>>, vector<1x8x256xf32>,
    %c0_15 = arith.constant 0 : index
    %c0_16 = arith.constant 0 : index
    %c0_17 = arith.constant 0 : index
    %47 = vector.load %arg4[%c0_15, %c0_16, %c0_17] : memref<1x8x256xf32, #tpu.memory_space<vmem>>, vector<1x8x256xf32>
    %48 = vector.shape_cast %47 : vector<1x8x256xf32> to vector<8x256xf32>
    %49 = vector.shape_cast %40 : vector<8x256xf32> to vector<1x8x256xf32>
    tpu.vector_store %arg4[%c0_15, %c0_16, %c0_17], %49 {strides = array<i32>} : memref<1x8x256xf32, #tpu.memory_space<vmem>>, vector<1x8x256xf32>,
    return
  }
  func.func @transform_0(%arg0: i32) -> (i32, i32, i32) {
    %c0_i32 = arith.constant 0 : i32
    %c0_i32_0 = arith.constant 0 : i32
    %c0_i32_1 = arith.constant 0 : i32
    return %arg0, %c0_i32, %c0_i32_0 : i32, i32, i32
  }
  func.func @transform_1(%arg0: i32) -> (i32, i32, i32) {
    %c0_i32 = arith.constant 0 : i32
    %c0_i32_0 = arith.constant 0 : i32
    %c0_i32_1 = arith.constant 0 : i32
    return %arg0, %c0_i32, %c0_i32_0 : i32, i32, i32
  }
  func.func @transform_2(%arg0: i32) -> (i32, i32, i32) {
    %c0_i32 = arith.constant 0 : i32
    %c0_i32_0 = arith.constant 0 : i32
    %c0_i32_1 = arith.constant 0 : i32
    return %arg0, %c0_i32, %c0_i32_0 : i32, i32, i32
  }
  func.func @transform_3(%arg0: i32) -> (i32, i32, i32) {
    %c0_i32 = arith.constant 0 : i32
    %c0_i32_0 = arith.constant 0 : i32
    %c0_i32_1 = arith.constant 0 : i32
    return %arg0, %c0_i32, %c0_i32_0 : i32, i32, i32
  }
}

</mosaic_0001>

<llo_original>
// kernel: tpu_custom_call.1
$region0: #{tpu_custom_call.1}
  #allocation0 [shape = 'u32[]', space=smem, size = 0x4, offset = 0x4, fixed_abs, tag = 'smem constant byte address 0x4 - core index']
  #allocation1 [shape = 'u32[72,128]{1,0:T(1,128)}', space=vmem, size = 0x9000, scoped, tag = 'internal scratch']
  %s0 = inlined_call_operand.hbm [shape: f32[1,8,256], index: 0, kind: input, shape index: {}]
  %s1 = inlined_call_operand.hbm [shape: f32[1,8,256], index: 1, kind: output, shape index: {0}]
  %s2 = inlined_call_operand.hbm [shape: f32[1,8,256], index: 2, kind: output, shape index: {1}]
  %s3 = inlined_call_operand.hbm [shape: f32[1,8,256], index: 3, kind: output, shape index: {2}]
  %4 = xla_tuple %s1, %s2, %s3
  %s5 = sld [smem:[#allocation0]]
  $region34: #{tpu_custom_call.1} parent=0
    _
  %s7 = ssub.s32 1, %s5
  %s8 = scalar_select 0, %s7, %s5
  $region1: #{tpu_custom_call.1} parent=0
    #allocation2 [shape = 'u8[8192]{0}', space=vmem, size = 0x2000, scoped, tag = 'input window, operand 0, single buffered']
    #allocation3 [shape = 's32[1]{0}', space=sflag, size = 0x4, scoped, tag = 'scoped memory for tpu_custom_call.1']
    #allocation4 [shape = 's32[1]{0}', space=sflag, size = 0x4, scoped, tag = 'scoped memory for tpu_custom_call.1']
    #allocation5 [shape = 'u8[8192]{0}', space=vmem, size = 0x2000, scoped, tag = 'output window, operand 0, single buffered']
    #allocation6 [shape = 'u8[8192]{0}', space=vmem, size = 0x2000, scoped, tag = 'output window, operand 1, single buffered']
    #allocation7 [shape = 's32[1]{0}', space=sflag, size = 0x4, scoped, tag = 'scoped memory for tpu_custom_call.1']
    #allocation8 [shape = 'u8[8192]{0}', space=vmem, size = 0x2000, scoped, tag = 'output window, operand 2, single buffered']
    %9 = vsyncpa [#allocation3], 0
    %10 = vsyncpa [#allocation4], 0
    %11 = vsyncpa [#allocation7], 0
    // Predicated region
    $region2: #{tpu_custom_call.1} parent=1 // pred_check
      _
    $region3: #{tpu_custom_call.1} parent=1 // pred_check_branch
      %13 = sbr.rel (0) target = $region5
    $region4: #{tpu_custom_call.1} parent=1 // pred_region
      %15 = vsyncadd [#allocation3], 0
      %s17 = sshll.u32 %s0, 4
      %s18 = int_to_ptr.hbm [resolvable:$true] %s17
      %s19 = sshll.u32 [#allocation2], 4
      %s20 = int_to_ptr.vmem [resolvable:$true] %s19
      %22 = dma.hbm_to_vmem [thread:$0]  %s18, 256, %s20, [#allocation3]
    $region5: #{tpu_custom_call.1} parent=1 // pred_fallthru
      _
    // Predicated region
    $region6: #{tpu_custom_call.1} parent=1 // pred_check
      _
    $region7: #{tpu_custom_call.1} parent=1 // pred_check_branch
      %24 = sbr.rel (0) target = $region9
    $region8: #{tpu_custom_call.1} parent=1 // pred_region
      %26 = dma.done [#allocation3], 256
    $region9: #{tpu_custom_call.1} parent=1 // pred_fallthru
      _
    %v27 = vld [vmem:[#allocation2] sm:$0xff]
    %v28 = vld [vmem:[#allocation2 + $0x8] sm:$0xff]
    %v29 = vlaneseq
    %v30 = vand.u32 %v29, 127
    %v31 = vadd.s32 %v30, 128
    %32 = vrot.lane.b32.xlu0 %v27, 112
    %v33 = vpop.permute.xlu0 %32
    %34 = vrot.lane.b32.xlu0 %v28, 112
    %v35 = vpop.permute.xlu0 %34
    %vm36 = vcmp.lt.s32.totalorder %v30, 112
    %v37 = vsel %vm36, %v33, %v35
    %v38 = vsel %vm36, %v35, %v33
    %39 = vrot.lane.b32.xlu0 %v27, 16
    %v40 = vpop.permute.xlu0 %39
    %41 = vrot.lane.b32.xlu0 %v28, 16
    %v42 = vpop.permute.xlu0 %41
    %vm43 = vcmp.lt.s32.totalorder %v30, 16
    %v44 = vsel %vm43, %v40, %v42
    %v45 = vsel %vm43, %v42, %v40
    %vm46 = vcmp.lt.s32.totalorder %v30, 240
    %vm47 = vcmp.lt.s32.totalorder %v31, 240
    %v48 = vsel %vm46, 1, 0
    %v49 = vsel %vm47, 1, 0
    %vm50 = vcmp.eq.s32.totalorder %v48, 1
    %vm51 = vcmp.eq.s32.totalorder %v49, 1
    %v52 = vsel %vm50, %v37, 0.0
    %v53 = vsel %vm51, %v38, 0.0
    %vm54 = vcmp.ge.s32.totalorder %v30, 16
    %vm55 = vcmp.ge.s32.totalorder %v31, 16
    %v56 = vsel %vm54, 1, 0
    %v57 = vsel %vm55, 1, 0
    %vm58 = vcmp.eq.s32.totalorder %v56, 1
    %vm59 = vcmp.eq.s32.totalorder %v57, 1
    %v60 = vsel %vm58, %v45, 0.0
    %v61 = vsel %vm59, %v44, 0.0
    %v62 = vsub.f32 %v52, %v60
    %v63 = vsub.f32 %v53, %v61
    %64 = vrot.lane.b32.xlu0 %v27, 127
    %v65 = vpop.permute.xlu0 %64
    %66 = vrot.lane.b32.xlu0 %v28, 127
    %v67 = vpop.permute.xlu0 %66
    %vm68 = vcmp.lt.s32.totalorder %v30, 127
    %v69 = vsel %vm68, %v65, %v67
    %v70 = vsel %vm68, %v67, %v65
    %71 = vrot.lane.b32.xlu0 %v27, 1
    %v72 = vpop.permute.xlu0 %71
    %73 = vrot.lane.b32.xlu0 %v28, 1
    %v74 = vpop.permute.xlu0 %73
    %vm75 = vcmp.lt.s32.totalorder %v30, 1
    %v76 = vsel %vm75, %v72, %v74
    %v77 = vsel %vm75, %v74, %v72
    %v78 = vand.u32 %v30, 15
    %v79 = vand.u32 %v31, 15
    %vm80 = vcmp.lt.s32.totalorder %v78, 15
    %vm81 = vcmp.lt.s32.totalorder %v79, 15
    %v82 = vsel %vm80, 1, 0
    %v83 = vsel %vm81, 1, 0
    %vm84 = vcmp.eq.s32.totalorder %v82, 1
    %vm85 = vcmp.eq.s32.totalorder %v83, 1
    %v86 = vsel %vm84, %v69, 0.0
    %v87 = vsel %vm85, %v70, 0.0
    %vm88 = vcmp.gt.s32.totalorder %v78, 0
    %vm89 = vcmp.gt.s32.totalorder %v79, 0
    %v90 = vsel %vm88, 1, 0
    %v91 = vsel %vm89, 1, 0
    %vm92 = vcmp.eq.s32.totalorder %v90, 1
    %vm93 = vcmp.eq.s32.totalorder %v91, 1
    %v94 = vsel %vm92, %v77, 0.0
    %v95 = vsel %vm93, %v76, 0.0
    %v96 = vsub.f32 %v86, %v94
    %v97 = vsub.f32 %v87, %v95
    %v98 = vmul.f32 %v62, %v62
    %v99 = vmul.f32 %v63, %v63
    %v100 = vmul.f32 %v96, %v96
    %v101 = vmul.f32 %v97, %v97
    %v102 = vadd.f32 %v98, %v100
    %v103 = vadd.f32 %v99, %v101
    %v104 = vadd.f32 %v102, 1e-06
    %v105 = vadd.f32 %v103, 1e-06
    %v106 = vrsqrt.pop %v104
    %v107 = vmul.f32 %v106, %v104
    %v108 = vmul.f32 %v107, %v106
    %v109 = vmul.f32 0.5, %v108
    %v110 = vsub.f32 1.5, %v109
    %v111 = vmul.f32 %v106, %v110
    %v112 = vmul.f32 %v104, %v111
    %vm113 = vcmp.eq.f32.partialorder %v104, inf
    %v114 = vsel %vm113, %v104, %v112
    %vm115 = vcmp.eq.f32.partialorder %v104, 0.0
    %v116 = vand.u32 %v104, 2147483648
    %v117 = vsel %vm115, %v116, %v114
    %v118 = vrsqrt.pop %v105
    %v119 = vmul.f32 %v118, %v105
    %v120 = vmul.f32 %v119, %v118
    %v121 = vmul.f32 0.5, %v120
    %v122 = vsub.f32 1.5, %v121
    %v123 = vmul.f32 %v118, %v122
    %v124 = vmul.f32 %v105, %v123
    %vm125 = vcmp.eq.f32.partialorder %v105, inf
    %v126 = vsel %vm125, %v105, %v124
    %vm127 = vcmp.eq.f32.partialorder %v105, 0.0
    %v128 = vand.u32 %v105, 2147483648
    %v129 = vsel %vm127, %v128, %v126
    %130 = vst [vmem:[#allocation5] sm:$0xff] %v96
    %131 = vst [vmem:[#allocation5 + $0x8] sm:$0xff] %v97
    %132 = vst [vmem:[#allocation6] sm:$0xff] %v62
    %133 = vst [vmem:[#allocation6 + $0x8] sm:$0xff] %v63
    %134 = vst [vmem:[#allocation8] sm:$0xff] %v117
    %135 = vst [vmem:[#allocation8 + $0x8] sm:$0xff] %v129
    // Predicated region
    $region10: #{tpu_custom_call.1} parent=1 // pred_check
      _
    $region11: #{tpu_custom_call.1} parent=1 // pred_check_branch
      %137 = sbr.rel (0) target = $region13
    $region12: #{tpu_custom_call.1} parent=1 // pred_region
      %139 = vsyncadd [#allocation4], 0
      %s141 = sshll.u32 [#allocation5], 4
      %s142 = int_to_ptr.vmem [resolvable:$true] %s141
      %s143 = sshll.u32 %s1, 4
      %s144 = int_to_ptr.hbm [resolvable:$true] %s143
      %146 = dma.vmem_to_hbm [thread:$0]  %s142, 256, %s144, [#allocation4]
    $region13: #{tpu_custom_call.1} parent=1 // pred_fallthru
      _
    // Predicated region
    $region14: #{tpu_custom_call.1} parent=1 // pred_check
      _
    $region15: #{tpu_custom_call.1} parent=1 // pred_check_branch
      %148 = sbr.rel (0) target = $region17
    $region16: #{tpu_custom_call.1} parent=1 // pred_region
      %150 = vsyncadd [#allocation7], 0
      %s152 = sshll.u32 [#allocation6], 4
      %s153 = int_to_ptr.vmem [resolvable:$true] %s152
      %s154 = sshll.u32 %s2, 4
      %s155 = int_to_ptr.hbm [resolvable:$true] %s154
      %157 = dma.vmem_to_hbm [thread:$0]  %s153, 256, %s155, [#allocation7]
    $region17: #{tpu_custom_call.1} parent=1 // pred_fallthru
      _
    // Predicated region
    $region18: #{tpu_custom_call.1} parent=1 // pred_check
      _
    $region19: #{tpu_custom_call.1} parent=1 // pred_check_branch
      %159 = sbr.rel (0) target = $region21
    $region20: #{tpu_custom_call.1} parent=1 // pred_region
      %161 = vsyncadd [#allocation7], 0
      %s163 = sshll.u32 [#allocation8], 4
      %s164 = int_to_ptr.vmem [resolvable:$true] %s163
      %s165 = sshll.u32 %s3, 4
      %s166 = int_to_ptr.hbm [resolvable:$true] %s165
      %168 = dma.vmem_to_hbm [thread:$0]  %s164, 256, %s166, [#allocation7]
    $region21: #{tpu_custom_call.1} parent=1 // pred_fallthru
      _
    // Predicated region
    $region22: #{tpu_custom_call.1} parent=1 // pred_check
      _
    $region23: #{tpu_custom_call.1} parent=1 // pred_check_branch
      %170 = sbr.rel (0) target = $region25
    $region24: #{tpu_custom_call.1} parent=1 // pred_region
      %172 = dma.done [#allocation4], 256
    $region25: #{tpu_custom_call.1} parent=1 // pred_fallthru
      _
    // Predicated region
    $region26: #{tpu_custom_call.1} parent=1 // pred_check
      _
    $region27: #{tpu_custom_call.1} parent=1 // pred_check_branch
      %174 = sbr.rel (0) target = $region29
    $region28: #{tpu_custom_call.1} parent=1 // pred_region
      %176 = dma.done [#allocation7], 256
    $region29: #{tpu_custom_call.1} parent=1 // pred_fallthru
      _
    // Predicated region
    $region30: #{tpu_custom_call.1} parent=1 // pred_check
      _
    $region31: #{tpu_custom_call.1} parent=1 // pred_check_branch
      %178 = sbr.rel (0) target = $region33
    $region32: #{tpu_custom_call.1} parent=1 // pred_region
      %180 = dma.done [#allocation7], 256
    $region33: #{tpu_custom_call.1} parent=1 // pred_fallthru
      _
    %181 = vsyncpa [#allocation3], 1
    %182 = vsyncpa [#allocation4], 1
    %183 = vsyncpa [#allocation7], 1

</llo_original>
